<compile_context>
chip_gen: v7x
topology: tpu7x:2x2x1
jax: 0.10.0
libtpu: 0.0.40
codegen_flags: <defaults>
</compile_context>

<pallas_src>
import functools

import jax
import jax.numpy as jnp
from jax import lax
from jax.experimental import pallas as pl
from jax.experimental.pallas import tpu as pltpu


_LANE = 128
_SUBLANE = 8
_NUM_CORES = 2   # v7x has 2 TensorCores/chip; extra axis is harmless on v5e/v6e.


def _round_up(x, m):
    return ((x + m - 1) // m) * m


def _dmi_kernel(logits_ref, tgt_ref, mat_ref, *, num_classes, batch, tb,
                steps_per_core):
    """One batch tile of mat += one_hot(target).T @ softmax(logits).

    logits_ref : (TB, C)  raw logits (ragged last tile contains unspecified rows).
    tgt_ref    : (1, TB)  int32 labels; rows >= batch carry label == C.
    mat_ref    : (C, C)   per-core accumulator (resident across the batch grid).
    """
    core = pl.program_id(0)
    step = pl.program_id(1)

    @pl.when(step == 0)
    def _init():
        mat_ref[...] = jnp.zeros_like(mat_ref)

    # Row validity handles (a) the ragged last tile and (b) grid positions whose
    # logits block index was clamped in the index_map (duplicate reads of the
    # last tile contribute exactly zero).
    base = (core * steps_per_core + step) * tb
    row_ids = base + lax.broadcasted_iota(jnp.int32, (tb, 1), 0)     # (TB, 1)
    valid = row_ids < batch

    # Mask BEFORE exp: unspecified boundary rows could produce Inf in exp and
    # 0 * Inf = NaN inside the MXU contraction even though the one-hot is zero.
    x = jnp.where(valid, logits_ref[...].astype(jnp.float32), 0.0)   # (TB, C)
    row_max = jnp.max(x, axis=1, keepdims=True)
    e = jnp.exp(x - row_max)
    denom = jnp.sum(e, axis=1, keepdims=True)
    # approx=True (EUP vrcp) would be cheaper, but log|det| downstream amplifies
    # error, so keep the exact reciprocal.
    probs = e * pl.reciprocal(denom, approx=False)                   # (TB, C)

    # One-hot built pre-transposed (C, TB): batch on lanes, so the dot_general
    # below contracts (C,TB)x(TB,C) with no runtime XLU transpose.  Padded /
    # invalid rows carry label == num_classes -> all-zero column.
    tgt = tgt_ref[...]                                               # (1, TB)
    cls = lax.broadcasted_iota(jnp.int32, (num_classes, tb), 0)      # (C, TB)
    onehot_t = (tgt == cls).astype(jnp.float32)

    # TODO(synk): for C >= ~256, casting operands to bf16 (keeping f32 accumulate)
    # is ~3-4x faster on the MXU, but log|det| amplifies the rounding — validate
    # before enabling.
    mat_ref[...] += lax.dot_general(
        onehot_t, probs,
        dimension_numbers=(((1,), (0,)), ((), ())),
        preferred_element_type=jnp.float32)


def dmi_joint_matrix(output, target, num_classes, tb=None):
    """Pallas part: mat = one_hot(target).T @ softmax(output, axis=1) -> (C, C) f32."""
    B, C = output.shape
    assert C == num_classes

    c_lanes = _round_up(C, _LANE)
    c_sub = _round_up(C, _SUBLANE)

    # Batch tile: budget ~4-8 MiB per (lane-padded) logits VMEM buffer so the
    # double-buffered working set stays well inside v7x's 32 MiB scoped VMEM
    # (64 MiB physical) and is tiny relative to v5e/v6e's 128 MiB, while the
    # ~0.35 us/step pipeline overhead is amortised over a large tile.
    if tb is None:
        per_buf = (8 << 20) if C <= 32 else (4 << 20)
        tb = max(_LANE, (per_buf // (4 * c_lanes)) // _LANE * _LANE)
        tb = min(tb, _round_up(B, _LANE))
    tb = _round_up(max(int(tb), _LANE), _LANE)

    n_tiles = -(-B // tb)                       # batch tiles actually backed by data
    spc = -(-n_tiles // _NUM_CORES)             # grid steps per core
    grid_batch = _NUM_CORES * spc * tb          # lane extent of the padded targets

    # Pad ONLY the (cheap) int32 targets: rows >= B get the out-of-range label C,
    # so their one-hot column is identically zero.  Logits are NOT padded.
    tgt = target.reshape(-1).astype(jnp.int32)
    tgt = jnp.pad(tgt, (0, grid_batch - B), constant_values=num_classes)
    tgt_row = tgt.reshape(1, grid_batch)

    # VMEM budget: 2x double-buffered logits + targets + 2x (C,C) accumulator.
    logits_buf = tb * c_lanes * 4
    tgt_buf = _SUBLANE * tb * 4
    out_buf = c_sub * c_lanes * 4
    need = 2 * logits_buf + 2 * tgt_buf + 2 * out_buf + (2 << 20)
    vmem_limit = int(min(48 << 20, max(32 << 20, need)))

    compiler_params = pltpu.CompilerParams(
        # Leading axis splits batch tiles across the two TensorCores on v7x;
        # the batch-tile axis is a reduction -> "arbitrary".
        dimension_semantics=("parallel", "arbitrary"),
        vmem_limit_bytes=vmem_limit)

    cost = pl.CostEstimate(
        flops=int(2 * B * C * C + 6 * B * C),
        transcendentals=int(B * C),
        bytes_accessed=int(4 * B * C + 4 * grid_batch + 4 * _NUM_CORES * C * C))

    kernel = functools.partial(
        _dmi_kernel, num_classes=C, batch=B, tb=tb, steps_per_core=spc)

    def logits_map(c, s):
        # Clamp so grid positions past the last real tile re-read a valid block
        # (their contribution is masked to zero in-kernel).  Never DMAs OOB.
        return (jnp.minimum(c * spc + s, n_tiles - 1), 0)

    # TODO(synk): if the per-tile DMA stays exposed on v5e, add
    # pipeline_mode=pl.Buffered(3) on the logits BlockSpec.
    partials = pl.pallas_call(
        kernel,
        out_shape=jax.ShapeDtypeStruct((_NUM_CORES, C, C), jnp.float32),
        grid_spec=pltpu.PrefetchScalarGridSpec(
            num_scalar_prefetch=0,
            grid=(_NUM_CORES, spc),
            in_specs=[pl.BlockSpec((tb, C), logits_map),
                      pl.BlockSpec((1, tb), lambda c, s: (0, c * spc + s))],
            out_specs=pl.BlockSpec((None, C, C), lambda c, s: (c, 0, 0))),
        compiler_params=compiler_params,
        cost_estimate=cost,
    )(output, tgt_row)

    return partials.sum(axis=0)                 # combine the per-core partials


def dmi_loss(output, target, num_classes, tb=None):
    """output: (B, C) float logits; target: (B,) int labels."""
    mat = dmi_joint_matrix(output, target, num_classes, tb=tb)
    # TODO(synk): determinant has no Pallas primitive; small CxC det done in JAX.
    # TODO(synk): for large B*C, |det| can over/underflow f32 — slogdet (or
    # normalising mat by B) is more robust but changes the +0.001 semantics.
    return -1.0 * jnp.log(jnp.abs(jnp.linalg.det(mat.astype(jnp.float32))) + 0.001)


def _reference_mat(output, target, num_classes):
    probs = jax.nn.softmax(output.astype(jnp.float32), axis=1)
    onehot = jax.nn.one_hot(target, num_classes, dtype=jnp.float32)
    return onehot.T @ probs


def _reference_dmi_loss(output, target, num_classes):
    mat = _reference_mat(output, target, num_classes)
    return -1.0 * jnp.log(jnp.abs(jnp.linalg.det(mat)) + 0.001)


if __name__ == "__main__":
    key = jax.random.PRNGKey(0)
    k1, k2, k3, k4 = jax.random.split(key, 4)

    # --- case 1: small C, ragged batch, explicit tb -> multiple tiles, a ragged
    #     last tile, and a fully out-of-range (clamped+masked) grid position.
    num_classes = 4
    batch = 300                         # tb=128 -> 3 real tiles, grid (2, 2)
    output = jax.random.normal(k1, (batch, num_classes), dtype=jnp.float32)
    target = jax.random.randint(k2, (batch,), 0, num_classes, dtype=jnp.int32)

    mat = dmi_joint_matrix(output, target, num_classes, tb=128)
    loss = dmi_loss(output, target, num_classes, tb=128)
    jax.block_until_ready((mat, loss))

    ref_mat = _reference_mat(output, target, num_classes)
    ref_loss = _reference_dmi_loss(output, target, num_classes)
    assert jnp.allclose(mat, ref_mat, atol=1e-3, rtol=1e-4), "small-C mat mismatch"
    assert jnp.allclose(loss, ref_loss, atol=5e-3, rtol=5e-3), (loss, ref_loss)

    # Same inputs through the auto-tile path (single tile, core-1 work masked out).
    mat_auto = dmi_joint_matrix(output, target, num_classes)
    jax.block_until_ready(mat_auto)
    assert jnp.allclose(mat_auto, ref_mat, atol=1e-3, rtol=1e-4), "auto-tb mismatch"

    # --- case 2: larger C (MXU well utilised), ragged batch.
    num_classes2 = 128
    batch2 = 500                        # tb=256 -> 2 tiles, grid (2, 1)
    output2 = jax.random.normal(k3, (batch2, num_classes2), dtype=jnp.float32)
    target2 = jax.random.randint(k4, (batch2,), 0, num_classes2, dtype=jnp.int32)

    mat2 = dmi_joint_matrix(output2, target2, num_classes2, tb=256)
    loss2 = dmi_loss(output2, target2, num_classes2, tb=256)
    jax.block_until_ready((mat2, loss2))

    ref_mat2 = _reference_mat(output2, target2, num_classes2)
    ref_loss2 = _reference_dmi_loss(output2, target2, num_classes2)
    assert jnp.allclose(mat2, ref_mat2, atol=1e-4, rtol=1e-4), "large-C mat mismatch"
    assert jnp.allclose(loss2, ref_loss2, atol=5e-3, rtol=5e-3), (loss2, ref_loss2)

    print("KERNEL_OK")
</pallas_src>

<mosaic_0001>
module attributes {stable_mosaic.version = 11 : i64} {
  func.func @_dmi_kernel(%arg0: i32, %arg1: i32, %arg2: memref<128x4xf32, #tpu.memory_space<vmem>>, %arg3: memref<1x128xi32, #tpu.memory_space<vmem>>, %arg4: memref<1x4x4xf32, #tpu.memory_space<vmem>>) attributes {dimension_semantics = [#tpu.dimension_semantics<parallel>, #tpu.dimension_semantics<arbitrary>], iteration_bounds = array<i64: 2, 2>, scalar_prefetch = 0 : i64, scratch_operands = 0 : i64, tpu.core_type = #tpu.core_type<tc>, window_params = [{transform_indices = @transform_0, window_bounds = array<i64: 128, 4>}, {transform_indices = @transform_1, window_bounds = array<i64: 1, 128>}, {transform_indices = @transform_2, window_bounds = array<i64: 1, 4, 4>}]} {
    %c0_i32 = arith.constant 0 : i32
    %0 = arith.cmpi eq, %arg1, %c0_i32 : i32
    %1 = arith.extui %0 : i1 to i32
    %c0_i32_0 = arith.constant 0 : i32
    %2 = arith.cmpi ne, %1, %c0_i32_0 : i32
    scf.if %2 {
      %cst_13 = arith.constant 0.000000e+00 : f32
      %39 = vector.broadcast %cst_13 : f32 to vector<4x4xf32>
      %c0_14 = arith.constant 0 : index
      %c0_15 = arith.constant 0 : index
      %c0_16 = arith.constant 0 : index
      %40 = vector.load %arg4[%c0_14, %c0_15, %c0_16] : memref<1x4x4xf32, #tpu.memory_space<vmem>>, vector<1x4x4xf32>
      %41 = vector.shape_cast %40 : vector<1x4x4xf32> to vector<4x4xf32>
      %42 = vector.shape_cast %39 : vector<4x4xf32> to vector<1x4x4xf32>
      tpu.vector_store %arg4[%c0_14, %c0_15, %c0_16], %42 {strides = array<i32>} : memref<1x4x4xf32, #tpu.memory_space<vmem>>, vector<1x4x4xf32>,
    } else {
    }
    %c2_i32 = arith.constant 2 : i32
    %3 = arith.muli %arg0, %c2_i32 : i32
    %4 = arith.addi %3, %arg1 : i32
    %c128_i32 = arith.constant 128 : i32
    %5 = arith.muli %4, %c128_i32 : i32
    %6 = tpu.iota {dimensions = array<i32: 0>} : vector<128x1xi32>
    %7 = vector.broadcast %5 : i32 to vector<128x1xi32>
    %8 = arith.addi %7, %6 : vector<128x1xi32>
    %c300_i32 = arith.constant 300 : i32
    %9 = vector.broadcast %c300_i32 : i32 to vector<128x1xi32>
    %10 = arith.cmpi slt, %8, %9 : vector<128x1xi32>
    %c0 = arith.constant 0 : index
    %c0_1 = arith.constant 0 : index
    %11 = vector.load %arg2[%c0, %c0_1] : memref<128x4xf32, #tpu.memory_space<vmem>>, vector<128x4xf32>
    %cst = arith.constant 0.000000e+00 : f32
    %12 = vector.shape_cast %10 : vector<128x1xi1> to vector<128x1xi1>
    %13 = vector.broadcast %12 : vector<128x1xi1> to vector<128x4xi1>
    %14 = vector.broadcast %cst : f32 to vector<128x4xf32>
    %15 = arith.select %13, %11, %14 : vector<128x4xi1>, vector<128x4xf32>
    %cst_2 = arith.constant dense<0xFF800000> : vector<128xf32>
    %16 = vector.multi_reduction <maximumf>, %15, %cst_2 [1] : vector<128x4xf32> to vector<128xf32>
    %17 = vector.shape_cast %16 : vector<128xf32> to vector<128x1xf32>
    %18 = vector.broadcast %17 : vector<128x1xf32> to vector<128x4xf32>
    %19 = arith.subf %15, %18 : vector<128x4xf32>
    %20 = math.exp %19 : vector<128x4xf32>
    %cst_3 = arith.constant dense<0.000000e+00> : vector<128xf32>
    %21 = vector.multi_reduction <add>, %20, %cst_3 [1] : vector<128x4xf32> to vector<128xf32>
    %22 = vector.shape_cast %21 : vector<128xf32> to vector<128x1xf32>
    %23 = tpu.reciprocal %22 : vector<128x1xf32> -> vector<128x1xf32>
    %24 = vector.broadcast %23 : vector<128x1xf32> to vector<128x4xf32>
    %25 = arith.mulf %20, %24 : vector<128x4xf32>
    %c0_4 = arith.constant 0 : index
    %c0_5 = arith.constant 0 : index
    %26 = vector.load %arg3[%c0_4, %c0_5] : memref<1x128xi32, #tpu.memory_space<vmem>>, vector<1x128xi32>
    %27 = tpu.iota {dimensions = array<i32: 0>} : vector<4x128xi32>
    %28 = vector.broadcast %26 : vector<1x128xi32> to vector<4x128xi32>
    %29 = arith.cmpi eq, %28, %27 : vector<4x128xi32>
    %30 = arith.extui %29 : vector<4x128xi1> to vector<4x128xi32>
    %31 = arith.sitofp %30 : vector<4x128xi32> to vector<4x128xf32>
    %c0_6 = arith.constant 0 : index
    %c0_7 = arith.constant 0 : index
    %c0_8 = arith.constant 0 : index
    %32 = vector.load %arg4[%c0_6, %c0_7, %c0_8] : memref<1x4x4xf32, #tpu.memory_space<vmem>>, vector<1x4x4xf32>
    %33 = vector.shape_cast %32 : vector<1x4x4xf32> to vector<4x4xf32>
    %cst_9 = arith.constant dense<0.000000e+00> : vector<4x4xf32>
    %34 = tpu.matmul %31, %25, %cst_9 {dimension_numbers = #tpu.dot_dimension_numbers<[1], [0], [0], [1], [0, 0, 1, 1], [], []>} : vector<4x128xf32>, vector<128x4xf32>, vector<4x4xf32> -> vector<4x4xf32>
    %35 = arith.addf %33, %34 : vector<4x4xf32>
    %c0_10 = arith.constant 0 : index
    %c0_11 = arith.constant 0 : index
    %c0_12 = arith.constant 0 : index
    %36 = vector.load %arg4[%c0_10, %c0_11, %c0_12] : memref<1x4x4xf32, #tpu.memory_space<vmem>>, vector<1x4x4xf32>
    %37 = vector.shape_cast %36 : vector<1x4x4xf32> to vector<4x4xf32>
    %38 = vector.shape_cast %35 : vector<4x4xf32> to vector<1x4x4xf32>
    tpu.vector_store %arg4[%c0_10, %c0_11, %c0_12], %38 {strides = array<i32>} : memref<1x4x4xf32, #tpu.memory_space<vmem>>, vector<1x4x4xf32>,
    return
  }
  func.func @transform_0(%arg0: i32, %arg1: i32) -> (i32, i32) {
    %c2_i32 = arith.constant 2 : i32
    %0 = arith.muli %arg0, %c2_i32 : i32
    %1 = arith.addi %0, %arg1 : i32
    %c2_i32_0 = arith.constant 2 : i32
    %2 = arith.minsi %1, %c2_i32_0 : i32
    %c0_i32 = arith.constant 0 : i32
    %c0_i32_1 = arith.constant 0 : i32
    return %2, %c0_i32 : i32, i32
  }
  func.func @transform_1(%arg0: i32, %arg1: i32) -> (i32, i32) {
    %c2_i32 = arith.constant 2 : i32
    %0 = arith.muli %arg0, %c2_i32 : i32
    %1 = arith.addi %0, %arg1 : i32
    %c0_i32 = arith.constant 0 : i32
    %c0_i32_0 = arith.constant 0 : i32
    return %c0_i32, %1 : i32, i32
  }
  func.func @transform_2(%arg0: i32, %arg1: i32) -> (i32, i32, i32) {
    %c0_i32 = arith.constant 0 : i32
    %c0_i32_0 = arith.constant 0 : i32
    %c0_i32_1 = arith.constant 0 : i32
    return %arg0, %c0_i32, %c0_i32_0 : i32, i32, i32
  }
}

</mosaic_0001>

<llo_original>
// kernel: tpu_custom_call.1
$region0: #{tpu_custom_call.1}
  #allocation0 [shape = 'u32[]', space=smem, size = 0x4, offset = 0x4, fixed_abs, tag = 'smem constant byte address 0x4 - core index']
  #allocation1 [shape = 'u32[144,128]{1,0:T(1,128)}', space=vmem, size = 0x12000, scoped, tag = 'internal scratch']
  %s0 = inlined_call_operand.vmem [shape: f32[300,4], index: 0, kind: input, shape index: {}]
  %s1 = inlined_call_operand.vmem [shape: s32[1,512], index: 1, kind: input, shape index: {}]
  %s2 = inlined_call_operand.hbm [shape: f32[2,4,4], index: 2, kind: output, shape index: {}]
  %s3 = sld [smem:[#allocation0]]
  $region45: #{tpu_custom_call.1} parent=0
    _
  %s5 = ssub.s32 1, %s3
  %s6 = scalar_select 0, %s5, %s3
  $region1: #{tpu_custom_call.1} parent=0
    #allocation2 [shape = 'u8[4096]{0}', space=vmem, size = 0x1000, scoped, tag = 'output window, operand 0']
    #allocation3 [shape = 's32[2]{0}', space=sflag, size = 0x8, scoped, tag = 'scoped memory for tpu_custom_call.1']
    %7 = vsyncpa [#allocation3], 0
    %s8 = scalar_lea.sflag [#allocation3], 1
    %9 = vsyncpa %s8, 0
    loop: start=0, step=1, limit=6
    $region2: #{tpu_custom_call.1} parent=1 // loop_pre_header
      _
    $region3: #{tpu_custom_call.1} parent=1 // loop_header
      %s11 = sphi 0, %s15
      %p12 = scmp.ge.s32.totalorder %s11, 6
      %s18 = sphi 0, %s30
      %s19 = sphi 0, %s26
      %s20 = sphi 0, %s18
      %s21 = sphi 0, %s19
      %s22 = sphi 0, %s20
      %s23 = sphi 0, %s21
      %s41 = sphi 0, %s43
      %s44 = sphi 0, %s41
      %s45 = sphi 0, %s44
      %s61 = sphi 0, %s45
      %s71 = sphi 0, %s73
      %s74 = sphi 0, %s71
      %s75 = sphi 0, %s74
      %s91 = sphi 0, %s75
      %s97 = sphi 0, %s99
      %s100 = sphi 0, %s97
      %s101 = sphi 0, %s100
      %s117 = sphi 0, %s101
    $region4: #{tpu_custom_call.1} parent=1 // loop_header_branch
      %14 = sbr.rel (%p12) target = $region8
    $region5: #{tpu_custom_call.1} parent=1 // loop_body
      %s16 = ssub.s32 %s11, 1
      %s17 = ssub.s32 %s11, 2
      %s24 = sadd.s32 1, %s19
      %p25 = scmp.ge.s32.totalorder %s24, 2
      %s26 = scalar_select %p25, 0, %s24
      %s27 = sadd.s32 1, %s18
      %s28 = scalar_select %p25, %s27, %s18
      %p29 = scmp.ge.s32.totalorder %s28, 2
      %s30 = scalar_select %p29, 0, %s28
      %s31 = smul.u32 %s18, 2
      %s32 = sadd.s32 %s31, %s19
      %p33 = scmp.lt.s32.totalorder %s32, 2
      %s34 = scalar_select %p33, %s32, 2
      %s35 = smul.u32 %s30, 2
      %s36 = sadd.s32 %s35, %s26
      %p37 = scmp.lt.s32.totalorder %s36, 2
      %s38 = scalar_select %p37, %s36, 2
      %s39 = ssub.s32 %s34, %s38
      %p40 = scmp.eq.s32.totalorder %s39, 0
      %s42 = sadd.s32 %s41, 1
      %s43 = scalar_select %p40, %s41, %s42
      %p46 = pneg %p40
      %p47 = scmp.eq.s32.totalorder %s11, 3
      %p48 = por %p46, %p47
      %p49 = scmp.ne.s32.totalorder %s41, %s44
      %p50 = scmp.eq.s32.totalorder %s11, 0
      %p51 = por %p49, %p50
      %p52 = scmp.ne.s32.totalorder %s41, %s44
      %p53 = scmp.eq.s32.totalorder %s16, 3
      %p54 = por %p52, %p53
      %p55 = scmp.ne.s32.totalorder %s44, %s45
      %p56 = scmp.eq.s32.totalorder %s16, 0
      %p57 = por %p55, %p56
      %p58 = scmp.ne.s32.totalorder %s44, %s45
      %p59 = scmp.eq.s32.totalorder %s17, 3
      %p60 = por %p58, %p59
      %p62 = scmp.ne.s32.totalorder %s45, %s61
      %p63 = scmp.eq.s32.totalorder %s17, 0
      %p64 = por %p62, %p63
      %s65 = smul.u32 %s18, 2
      %s66 = sadd.s32 %s65, %s19
      %s67 = smul.u32 %s30, 2
      %s68 = sadd.s32 %s67, %s26
      %s69 = ssub.s32 %s66, %s68
      %p70 = scmp.eq.s32.totalorder %s69, 0
      %s72 = sadd.s32 %s71, 1
      %s73 = scalar_select %p70, %s71, %s72
      %p76 = pneg %p70
      %p77 = scmp.eq.s32.totalorder %s11, 3
      %p78 = por %p76, %p77
      %p79 = scmp.ne.s32.totalorder %s71, %s74
      %p80 = scmp.eq.s32.totalorder %s11, 0
      %p81 = por %p79, %p80
      %p82 = scmp.ne.s32.totalorder %s71, %s74
      %p83 = scmp.eq.s32.totalorder %s16, 3
      %p84 = por %p82, %p83
      %p85 = scmp.ne.s32.totalorder %s74, %s75
      %p86 = scmp.eq.s32.totalorder %s16, 0
      %p87 = por %p85, %p86
      %p88 = scmp.ne.s32.totalorder %s74, %s75
      %p89 = scmp.eq.s32.totalorder %s17, 3
      %p90 = por %p88, %p89
      %p92 = scmp.ne.s32.totalorder %s75, %s91
      %p93 = scmp.eq.s32.totalorder %s17, 0
      %p94 = por %p92, %p93
      %s95 = ssub.s32 %s18, %s30
      %p96 = scmp.eq.s32.totalorder %s95, 0
      %s98 = sadd.s32 %s97, 1
      %s99 = scalar_select %p96, %s97, %s98
      %p102 = pneg %p96
      %p103 = scmp.eq.s32.totalorder %s11, 3
      %p104 = por %p102, %p103
      %p105 = scmp.ne.s32.totalorder %s97, %s100
      %p106 = scmp.eq.s32.totalorder %s11, 0
      %p107 = por %p105, %p106
      %p108 = scmp.ne.s32.totalorder %s97, %s100
      %p109 = scmp.eq.s32.totalorder %s16, 3
      %p110 = por %p108, %p109
      %p111 = scmp.ne.s32.totalorder %s100, %s101
      %p112 = scmp.eq.s32.totalorder %s16, 0
      %p113 = por %p111, %p112
      %p114 = scmp.ne.s32.totalorder %s100, %s101
      %p115 = scmp.eq.s32.totalorder %s17, 3
      %p116 = por %p114, %p115
      %p118 = scmp.ne.s32.totalorder %s101, %s117
      %p119 = scmp.eq.s32.totalorder %s17, 0
      %p120 = por %p118, %p119
      %p121 = scmp.le.s32.totalorder 1, %s11
      %p122 = scmp.lt.s32.totalorder %s11, 5
      %p123 = pnand %p121, %p122
      %p124 = pneg %p123
      // Predicated region
      $region9: #{tpu_custom_call.1} parent=5 // pred_check
        _
      $region10: #{tpu_custom_call.1} parent=5 // pred_check_branch
        %126 = sbr.rel (%p123) target = $region12
      $region11: #{tpu_custom_call.1} parent=5 // pred_region
        %s127 = ssub.s32 %s11, 1
      $region12: #{tpu_custom_call.1} parent=5 // pred_fallthru
        _
      %p128 = scmp.lt.s32.totalorder %s11, 4
      // Predicated region
      $region13: #{tpu_custom_call.1} parent=5 // pred_check
        %p129 = pneg %p128
      $region14: #{tpu_custom_call.1} parent=5 // pred_check_branch
        %131 = sbr.rel (%p129) target = $region16
      $region15: #{tpu_custom_call.1} parent=5 // pred_region
        // Predicated region
        $region17: #{tpu_custom_call.1} parent=15 // pred_check
          %p132 = pneg %p51
        $region18: #{tpu_custom_call.1} parent=15 // pred_check_branch
          %134 = sbr.rel (%p132) target = $region20
        $region19: #{tpu_custom_call.1} parent=15 // pred_region
          %s135 = smul.u32 %s18, 2
          %s136 = sadd.s32 %s135, %s19
          %p137 = scmp.lt.s32.totalorder %s136, 2
          %s138 = scalar_select %p137, %s136, 2
          %s139 = smul.u32 16, %s138
          %s140 = ssub.s32 38, %s139
          %p141 = scmp.lt.s32.totalorder %s140, 16
          %s142 = scalar_select %p141, %s140, 16
          %s143 = smul.u32 128, %s142
          %p144 = scmp.lt.s32.totalorder %s139, 37
          %s145 = scalar_select %p144, %s139, 37
          %s146 = smul.addr %s145, 8
          %s147 = scalar_lea.vmem %s0, %s146
          %s148 = smul.u32 %s18, 2
          %s149 = sadd.s32 %s148, %s19
          %p150 = scmp.lt.s32.totalorder %s149, 2
          %s151 = scalar_select %p150, %s149, 2
          %s152 = smul.u32 16, %s151
          %s153 = ssub.s32 38, %s152
          %p154 = scmp.lt.s32.totalorder %s153, 16
          %s155 = scalar_select %p154, %s153, 16
          %s156 = smul.u32 128, %s155
        $region20: #{tpu_custom_call.1} parent=15 // pred_fallthru
          _
        // Predicated region
        $region21: #{tpu_custom_call.1} parent=15 // pred_check
          %p157 = pneg %p81
        $region22: #{tpu_custom_call.1} parent=15 // pred_check_branch
          %159 = sbr.rel (%p157) target = $region24
        $region23: #{tpu_custom_call.1} parent=15 // pred_region
          %s160 = smul.u32 %s18, 2
          %s161 = sadd.s32 %s160, %s19
          %p162 = scmp.lt.s32.totalorder %s161, 3
          %s163 = scalar_select %p162, %s161, 3
          %s164 = scalar_lea.vmem %s1, %s163
          %s165 = smul.u32 %s18, 2
          %s166 = sadd.s32 %s165, %s19
        $region24: #{tpu_custom_call.1} parent=15 // pred_fallthru
          _
      $region16: #{tpu_custom_call.1} parent=5 // pred_fallthru
        _
      %p167 = scmp.le.s32.totalorder 1, %s11
      %p168 = scmp.lt.s32.totalorder %s11, 5
      %p169 = pnand %p167, %p168
      %p170 = pneg %p169
      // Predicated region
      $region25: #{tpu_custom_call.1} parent=5 // pred_check
        _
      $region26: #{tpu_custom_call.1} parent=5 // pred_check_branch
        %172 = sbr.rel (%p169) target = $region28
      $region27: #{tpu_custom_call.1} parent=5 // pred_region
        %s173 = ssub.s32 %s11, 1
        %s174 = smul.u32 %s20, 2
        %s175 = sadd.s32 %s174, %s21
        %p176 = scmp.lt.s32.totalorder %s175, 2
        %s177 = scalar_select %p176, %s175, 2
        %s178 = smul.u32 16, %s177
        %s179 = ssub.s32 38, %s178
        %p180 = scmp.lt.s32.totalorder %s179, 16
        %s181 = scalar_select %p180, %s179, 16
        %s182 = smul.u32 128, %s181
        %p183 = scmp.lt.s32.totalorder %s178, 37
        %s184 = scalar_select %p183, %s178, 37
        %s185 = smul.addr %s184, 8
        %s186 = scalar_lea.vmem %s0, %s185
        %p187 = pneg %p57
        %p188 = pneg %p54
        %s189 = smul.u32 %s20, 2
        %s190 = sadd.s32 %s189, %s21
        %p191 = scmp.lt.s32.totalorder %s190, 3
        %s192 = scalar_select %p191, %s190, 3
        %s193 = scalar_lea.vmem %s1, %s192
        %p194 = pneg %p87
        %p195 = pneg %p84
        %p196 = pneg %p113
        %p197 = pneg %p110
        %s198 = sand.u32 %s100, 1
        %s199 = scalar_lea.sflag [#allocation3], %s198
        %s200 = sand.u32 %s100, 1
        %s201 = smul.addr %s200, 4
        %s202 = scalar_lea.vmem [#allocation2], %s201
        %s203 = smul.u32 %s20, 2
        %s204 = sadd.s32 %s203, %s21
        %p205 = scmp.lt.s32.totalorder %s204, 2
        %s206 = scalar_select %p205, %s204, 2
        %s207 = smul.u32 16, %s206
        %s208 = ssub.s32 38, %s207
        %p209 = scmp.lt.s32.totalorder %s208, 16
        %s210 = scalar_select %p209, %s208, 16
        %s211 = smul.u32 128, %s210
        %p212 = scmp.lt.s32.totalorder %s207, 37
        %s213 = scalar_select %p212, %s207, 37
        %s214 = smul.addr %s213, 8
        %s215 = scalar_lea.vmem %s0, %s214
        %s216 = smul.u32 %s20, 2
        %s217 = sadd.s32 %s216, %s21
        %p218 = scmp.lt.s32.totalorder %s217, 2
        %s219 = scalar_select %p218, %s217, 2
        %s220 = smul.u32 16, %s219
        %s221 = ssub.s32 38, %s220
        %p222 = scmp.lt.s32.totalorder %s221, 16
        %s223 = scalar_select %p222, %s221, 16
        %s224 = smul.u32 128, %s223
        %s225 = smul.u32 %s20, 2
        %s226 = sadd.s32 %s225, %s21
        %p227 = scmp.lt.s32.totalorder %s226, 3
        %s228 = scalar_select %p227, %s226, 3
        %s229 = scalar_lea.vmem %s1, %s228
        %s230 = smul.u32 %s20, 2
        %s231 = sadd.s32 %s230, %s21
        %p232 = scmp.eq.s32.totalorder %s21, 0
        // Predicated region
        $region29: #{tpu_custom_call.1} parent=27 // pred_check
          %p233 = pneg %p232
        $region30: #{tpu_custom_call.1} parent=27 // pred_check_branch
          %235 = sbr.rel (%p233) target = $region32
        $region31: #{tpu_custom_call.1} parent=27 // pred_region
          %vm236 = vcmask 27648
          %237 = vst.msk [vmem:[%s202] sm:$0xf] %vm236, 0.0
        $region32: #{tpu_custom_call.1} parent=27 // pred_fallthru
          _
        %s238 = smul.u32 %s20, 2
        %s239 = sadd.s32 %s238, %s21
        %s240 = smul.u32 %s239, 128
        %v241 = vlaneseq
        %v242 = vshrl.u32 %v241, 7
        %v243 = vadd.s32 %v242, 8
        %v244 = vadd.s32 %v242, 16
        %v245 = vadd.s32 %v242, 24
        %v246 = vadd.s32 %v242, 32
        %v247 = vadd.s32 %v242, 40
        %v248 = vadd.s32 %v242, 48
        %v249 = vadd.s32 %v242, 56
        %v250 = vadd.s32 %v242, 64
        %v251 = vadd.s32 %v242, 72
        %v252 = vadd.s32 %v242, 80
        %v253 = vadd.s32 %v242, 88
        %v254 = vadd.s32 %v242, 96
        %v255 = vadd.s32 %v242, 104
        %v256 = vadd.s32 %v242, 112
        %v257 = vadd.s32 %v242, 120
        %v258 = vstv %s240
        %v259 = vadd.s32 %v258, %v242
        %v260 = vadd.s32 %v258, %v243
        %v261 = vadd.s32 %v258, %v244
        %v262 = vadd.s32 %v258, %v245
        %v263 = vadd.s32 %v258, %v246
        %v264 = vadd.s32 %v258, %v247
        %v265 = vadd.s32 %v258, %v248
        %v266 = vadd.s32 %v258, %v249
        %v267 = vadd.s32 %v258, %v250
        %v268 = vadd.s32 %v258, %v251
        %v269 = vadd.s32 %v258, %v252
        %v270 = vadd.s32 %v258, %v253
        %v271 = vadd.s32 %v258, %v254
        %v272 = vadd.s32 %v258, %v255
        %v273 = vadd.s32 %v258, %v256
        %v274 = vadd.s32 %v258, %v257
        %vm275 = vcmp.lt.s32.totalorder %v259, 300
        %vm276 = vcmp.lt.s32.totalorder %v260, 300
        %vm277 = vcmp.lt.s32.totalorder %v261, 300
        %vm278 = vcmp.lt.s32.totalorder %v262, 300
        %vm279 = vcmp.lt.s32.totalorder %v263, 300
        %vm280 = vcmp.lt.s32.totalorder %v264, 300
        %vm281 = vcmp.lt.s32.totalorder %v265, 300
        %vm282 = vcmp.lt.s32.totalorder %v266, 300
        %vm283 = vcmp.lt.s32.totalorder %v267, 300
        %vm284 = vcmp.lt.s32.totalorder %v268, 300
        %vm285 = vcmp.lt.s32.totalorder %v269, 300
        %vm286 = vcmp.lt.s32.totalorder %v270, 300
        %vm287 = vcmp.lt.s32.totalorder %v271, 300
        %vm288 = vcmp.lt.s32.totalorder %v272, 300
        %vm289 = vcmp.lt.s32.totalorder %v273, 300
        %vm290 = vcmp.lt.s32.totalorder %v274, 300
        %v291 = vld [vmem:[%s215] sm:$0xff]
        %v292 = vld [vmem:[%s215 + $0x8] sm:$0xff]
        %v293 = vld [vmem:[%s215 + $0x10] sm:$0xff]
        %v294 = vld [vmem:[%s215 + $0x18] sm:$0xff]
        %v295 = vld [vmem:[%s215 + $0x20] sm:$0xff]
        %v296 = vld [vmem:[%s215 + $0x28] sm:$0xff]
        %v297 = vld [vmem:[%s215 + $0x30] sm:$0xff]
        %v298 = vld [vmem:[%s215 + $0x38] sm:$0xff]
        %v299 = vld [vmem:[%s215 + $0x40] sm:$0xff]
        %v300 = vld [vmem:[%s215 + $0x48] sm:$0xff]
        %v301 = vld [vmem:[%s215 + $0x50] sm:$0xff]
        %v302 = vld [vmem:[%s215 + $0x58] sm:$0xff]
        %v303 = vld [vmem:[%s215 + $0x60] sm:$0xff]
        %v304 = vld [vmem:[%s215 + $0x68] sm:$0xff]
        %v305 = vld [vmem:[%s215 + $0x70] sm:$0xff]
        %v306 = vld [vmem:[%s215 + $0x78] sm:$0xff]
        %v307 = vsel %vm275, 1, 0
        %v308 = vsel %vm276, 1, 0
        %v309 = vsel %vm277, 1, 0
        %v310 = vsel %vm278, 1, 0
        %v311 = vsel %vm279, 1, 0
        %v312 = vsel %vm280, 1, 0
        %v313 = vsel %vm281, 1, 0
        %v314 = vsel %vm282, 1, 0
        %v315 = vsel %vm283, 1, 0
        %v316 = vsel %vm284, 1, 0
        %v317 = vsel %vm285, 1, 0
        %v318 = vsel %vm286, 1, 0
        %v319 = vsel %vm287, 1, 0
        %v320 = vsel %vm288, 1, 0
        %v321 = vsel %vm289, 1, 0
        %v322 = vsel %vm290, 1, 0
        %vm323 = vcmp.eq.s32.totalorder %v307, 1
        %vm324 = vcmp.eq.s32.totalorder %v308, 1
        %vm325 = vcmp.eq.s32.totalorder %v309, 1
        %vm326 = vcmp.eq.s32.totalorder %v310, 1
        %vm327 = vcmp.eq.s32.totalorder %v311, 1
        %vm328 = vcmp.eq.s32.totalorder %v312, 1
        %vm329 = vcmp.eq.s32.totalorder %v313, 1
        %vm330 = vcmp.eq.s32.totalorder %v314, 1
        %vm331 = vcmp.eq.s32.totalorder %v315, 1
        %vm332 = vcmp.eq.s32.totalorder %v316, 1
        %vm333 = vcmp.eq.s32.totalorder %v317, 1
        %vm334 = vcmp.eq.s32.totalorder %v318, 1
        %vm335 = vcmp.eq.s32.totalorder %v319, 1
        %vm336 = vcmp.eq.s32.totalorder %v320, 1
        %vm337 = vcmp.eq.s32.totalorder %v321, 1
        %vm338 = vcmp.eq.s32.totalorder %v322, 1
        %v339 = vsel %vm323, %v291, 0.0
        %v340 = vsel %vm324, %v292, 0.0
        %v341 = vsel %vm325, %v293, 0.0
        %v342 = vsel %vm326, %v294, 0.0
        %v343 = vsel %vm327, %v295, 0.0
        %v344 = vsel %vm328, %v296, 0.0
        %v345 = vsel %vm329, %v297, 0.0
        %v346 = vsel %vm330, %v298, 0.0
        %v347 = vsel %vm331, %v299, 0.0
        %v348 = vsel %vm332, %v300, 0.0
        %v349 = vsel %vm333, %v301, 0.0
        %v350 = vsel %vm334, %v302, 0.0
        %v351 = vsel %vm335, %v303, 0.0
        %v352 = vsel %vm336, %v304, 0.0
        %v353 = vsel %vm337, %v305, 0.0
        %v354 = vsel %vm338, %v306, 0.0
        %vm355 = vcmask 31744
        %v356 = vsel %vm355, %v339, -inf
        %357 = vmax.xlane.f32.xlu0 %v356
        %v358 = vpop.xlane.xlu0 %357
        %v359 = vsel %vm355, %v340, -inf
        %360 = vmax.xlane.f32.xlu0 %v359
        %v361 = vpop.xlane.xlu0 %360
        %v362 = vsel %vm355, %v341, -inf
        %363 = vmax.xlane.f32.xlu0 %v362
        %v364 = vpop.xlane.xlu0 %363
        %v365 = vsel %vm355, %v342, -inf
        %366 = vmax.xlane.f32.xlu0 %v365
        %v367 = vpop.xlane.xlu0 %366
        %v368 = vsel %vm355, %v343, -inf
        %369 = vmax.xlane.f32.xlu0 %v368
        %v370 = vpop.xlane.xlu0 %369
        %v371 = vsel %vm355, %v344, -inf
        %372 = vmax.xlane.f32.xlu0 %v371
        %v373 = vpop.xlane.xlu0 %372
        %v374 = vsel %vm355, %v345, -inf
        %375 = vmax.xlane.f32.xlu0 %v374
        %v376 = vpop.xlane.xlu0 %375
        %v377 = vsel %vm355, %v346, -inf
        %378 = vmax.xlane.f32.xlu0 %v377
        %v379 = vpop.xlane.xlu0 %378
        %v380 = vsel %vm355, %v347, -inf
        %381 = vmax.xlane.f32.xlu0 %v380
        %v382 = vpop.xlane.xlu0 %381
        %v383 = vsel %vm355, %v348, -inf
        %384 = vmax.xlane.f32.xlu0 %v383
        %v385 = vpop.xlane.xlu0 %384
        %v386 = vsel %vm355, %v349, -inf
        %387 = vmax.xlane.f32.xlu0 %v386
        %v388 = vpop.xlane.xlu0 %387
        %v389 = vsel %vm355, %v350, -inf
        %390 = vmax.xlane.f32.xlu0 %v389
        %v391 = vpop.xlane.xlu0 %390
        %v392 = vsel %vm355, %v351, -inf
        %393 = vmax.xlane.f32.xlu0 %v392
        %v394 = vpop.xlane.xlu0 %393
        %v395 = vsel %vm355, %v352, -inf
        %396 = vmax.xlane.f32.xlu0 %v395
        %v397 = vpop.xlane.xlu0 %396
        %v398 = vsel %vm355, %v353, -inf
        %399 = vmax.xlane.f32.xlu0 %v398
        %v400 = vpop.xlane.xlu0 %399
        %v401 = vsel %vm355, %v354, -inf
        %402 = vmax.xlane.f32.xlu0 %v401
        %v403 = vpop.xlane.xlu0 %402
        %v404 = vsub.f32 %v339, %v358
        %v405 = vsub.f32 %v340, %v361
        %v406 = vsub.f32 %v341, %v364
        %v407 = vsub.f32 %v342, %v367
        %v408 = vsub.f32 %v343, %v370
        %v409 = vsub.f32 %v344, %v373
        %v410 = vsub.f32 %v345, %v376
        %v411 = vsub.f32 %v346, %v379
        %v412 = vsub.f32 %v347, %v382
        %v413 = vsub.f32 %v348, %v385
        %v414 = vsub.f32 %v349, %v388
        %v415 = vsub.f32 %v350, %v391
        %v416 = vsub.f32 %v351, %v394
        %v417 = vsub.f32 %v352, %v397
        %v418 = vsub.f32 %v353, %v400
        %v419 = vsub.f32 %v354, %v403
        %v420 = vmul.f32 %v404, 1.442695
        %v421 = vpow.pop %v420
        %v422 = vmul.f32 %v405, 1.442695
        %v423 = vpow.pop %v422
        %v424 = vmul.f32 %v406, 1.442695
        %v425 = vpow.pop %v424
        %v426 = vmul.f32 %v407, 1.442695
        %v427 = vpow.pop %v426
        %v428 = vmul.f32 %v408, 1.442695
        %v429 = vpow.pop %v428
        %v430 = vmul.f32 %v409, 1.442695
        %v431 = vpow.pop %v430
        %v432 = vmul.f32 %v410, 1.442695
        %v433 = vpow.pop %v432
        %v434 = vmul.f32 %v411, 1.442695
        %v435 = vpow.pop %v434
        %v436 = vmul.f32 %v412, 1.442695
        %v437 = vpow.pop %v436
        %v438 = vmul.f32 %v413, 1.442695
        %v439 = vpow.pop %v438
        %v440 = vmul.f32 %v414, 1.442695
        %v441 = vpow.pop %v440
        %v442 = vmul.f32 %v415, 1.442695
        %v443 = vpow.pop %v442
        %v444 = vmul.f32 %v416, 1.442695
        %v445 = vpow.pop %v444
        %v446 = vmul.f32 %v417, 1.442695
        %v447 = vpow.pop %v446
        %v448 = vmul.f32 %v418, 1.442695
        %v449 = vpow.pop %v448
        %v450 = vmul.f32 %v419, 1.442695
        %v451 = vpow.pop %v450
        %v452 = vsel %vm355, %v421, 0.0
        %453 = vadd.xlane.f32.xlu0 %v452
        %v454 = vpop.xlane.xlu0 %453
        %v455 = vsel %vm355, %v423, 0.0
        %456 = vadd.xlane.f32.xlu0 %v455
        %v457 = vpop.xlane.xlu0 %456
        %v458 = vsel %vm355, %v425, 0.0
        %459 = vadd.xlane.f32.xlu0 %v458
        %v460 = vpop.xlane.xlu0 %459
        %v461 = vsel %vm355, %v427, 0.0
        %462 = vadd.xlane.f32.xlu0 %v461
        %v463 = vpop.xlane.xlu0 %462
        %v464 = vsel %vm355, %v429, 0.0
        %465 = vadd.xlane.f32.xlu0 %v464
        %v466 = vpop.xlane.xlu0 %465
        %v467 = vsel %vm355, %v431, 0.0
        %468 = vadd.xlane.f32.xlu0 %v467
        %v469 = vpop.xlane.xlu0 %468
        %v470 = vsel %vm355, %v433, 0.0
        %471 = vadd.xlane.f32.xlu0 %v470
        %v472 = vpop.xlane.xlu0 %471
        %v473 = vsel %vm355, %v435, 0.0
        %474 = vadd.xlane.f32.xlu0 %v473
        %v475 = vpop.xlane.xlu0 %474
        %v476 = vsel %vm355, %v437, 0.0
        %477 = vadd.xlane.f32.xlu0 %v476
        %v478 = vpop.xlane.xlu0 %477
        %v479 = vsel %vm355, %v439, 0.0
        %480 = vadd.xlane.f32.xlu0 %v479
        %v481 = vpop.xlane.xlu0 %480
        %v482 = vsel %vm355, %v441, 0.0
        %483 = vadd.xlane.f32.xlu0 %v482
        %v484 = vpop.xlane.xlu0 %483
        %v485 = vsel %vm355, %v443, 0.0
        %486 = vadd.xlane.f32.xlu0 %v485
        %v487 = vpop.xlane.xlu0 %486
        %v488 = vsel %vm355, %v445, 0.0
        %489 = vadd.xlane.f32.xlu0 %v488
        %v490 = vpop.xlane.xlu0 %489
        %v491 = vsel %vm355, %v447, 0.0
        %492 = vadd.xlane.f32.xlu0 %v491
        %v493 = vpop.xlane.xlu0 %492
        %v494 = vsel %vm355, %v449, 0.0
        %495 = vadd.xlane.f32.xlu0 %v494
        %v496 = vpop.xlane.xlu0 %495
        %v497 = vsel %vm355, %v451, 0.0
        %498 = vadd.xlane.f32.xlu0 %v497
        %v499 = vpop.xlane.xlu0 %498
        %v500 = vrcp.pop %v454
        %v501 = vrcp.pop %v457
        %v502 = vrcp.pop %v460
        %v503 = vrcp.pop %v463
        %v504 = vrcp.pop %v466
        %v505 = vrcp.pop %v469
        %v506 = vrcp.pop %v472
        %v507 = vrcp.pop %v475
        %v508 = vrcp.pop %v478
        %v509 = vrcp.pop %v481
        %v510 = vrcp.pop %v484
        %v511 = vrcp.pop %v487
        %v512 = vrcp.pop %v490
        %v513 = vrcp.pop %v493
        %v514 = vrcp.pop %v496
        %v515 = vrcp.pop %v499
        %v516 = vmul.f32 %v421, %v500
        %v517 = vmul.f32 %v423, %v501
        %v518 = vmul.f32 %v425, %v502
        %v519 = vmul.f32 %v427, %v503
        %v520 = vmul.f32 %v429, %v504
        %v521 = vmul.f32 %v431, %v505
        %v522 = vmul.f32 %v433, %v506
        %v523 = vmul.f32 %v435, %v507
        %v524 = vmul.f32 %v437, %v508
        %v525 = vmul.f32 %v439, %v509
        %v526 = vmul.f32 %v441, %v510
        %v527 = vmul.f32 %v443, %v511
        %v528 = vmul.f32 %v445, %v512
        %v529 = vmul.f32 %v447, %v513
        %v530 = vmul.f32 %v449, %v514
        %v531 = vmul.f32 %v451, %v515
        %v532 = vld [vmem:[%s229] sm:$0x1]
        %v533 = vlaneseq
        %v534 = vshrl.u32 %v533, 7
        %v535 = vsub.s32 0, %v534
        %v536 = vrot.slane %v532, %v535
        %vm537 = vcmp.eq.s32.totalorder %v536, %v242
        %v538 = vsel %vm537, 1, 0
        %v539 = vcvt.s32.f32 %v538
        %v540 = vld [vmem:[%s202] sm:$0xf]
        %541 = vmatprep.subr.mxu0 0.0
        %542 = vmatpush1.msra.mxu0 %v516
        %543 = vmatprep.subr.mxu0 0.0
        %544 = vmatpush1.msra.mxu0 %v517
        %545 = vmatprep.subr.mxu0 0.0
        %546 = vmatpush1.msra.mxu0 %v518
        %547 = vmatprep.subr.mxu0 0.0
        %548 = vmatpush1.msra.mxu0 %v519
        %549 = vmatprep.subr.mxu0 0.0
        %550 = vmatpush1.msra.mxu0 %v520
        %551 = vmatprep.subr.mxu0 0.0
        %552 = vmatpush1.msra.mxu0 %v521
        %553 = vmatprep.subr.mxu0 0.0
        %554 = vmatpush1.msra.mxu0 %v522
        %555 = vmatprep.subr.mxu0 0.0
        %556 = vmatpush1.msra.mxu0 %v523
        %557 = vmatprep.subr.mxu0 0.0
        %558 = vmatpush1.msra.mxu0 %v524
        %559 = vmatprep.subr.mxu0 0.0
        %560 = vmatpush1.msra.mxu0 %v525
        %561 = vmatprep.subr.mxu0 0.0
        %562 = vmatpush1.msra.mxu0 %v526
        %563 = vmatprep.subr.mxu0 0.0
        %564 = vmatpush1.msra.mxu0 %v527
        %565 = vmatprep.subr.mxu0 0.0
        %566 = vmatpush1.msra.mxu0 %v528
        %567 = vmatprep.subr.mxu0 0.0
        %568 = vmatpush1.msra.mxu0 %v529
        %569 = vmatprep.subr.mxu0 0.0
        %570 = vmatpush1.msra.mxu0 %v530
        %571 = vmatprep.subr.mxu0 0.0
        %572 = vmatpush1.msra.mxu0 %v531
        %573 = vmatprep.subr.mxu0 0.0
        %574 = vmatpush1.msra.mxu0 0.0
        %575 = vmatprep.subr.mxu0 0.0
        %576 = vmatpush1.msra.mxu0 0.0
        %577 = vmatprep.subr.mxu0 0.0
        %578 = vmatpush1.msra.mxu0 0.0
        %579 = vmatprep.subr.mxu0 0.0
        %580 = vmatpush1.msra.mxu0 0.0
        %581 = vmatprep.subr.mxu0 0.0
        %582 = vmatpush1.msra.mxu0 0.0
        %583 = vmatprep.subr.mxu0 0.0
        %584 = vmatpush1.msra.mxu0 0.0
        %585 = vmatprep.subr.mxu0 0.0
        %586 = vmatpush1.msra.mxu0 0.0
        %587 = vmatprep.subr.mxu0 0.0
        %588 = vmatpush1.msra.mxu0 0.0
        %589 = vmatprep.subr.mxu0 0.0
        %590 = vmatpush1.msra.mxu0 0.0
        %591 = vmatprep.subr.mxu0 0.0
        %592 = vmatpush1.msra.mxu0 0.0
        %593 = vmatprep.subr.mxu0 0.0
        %594 = vmatpush1.msra.mxu0 0.0
        %595 = vmatprep.subr.mxu0 0.0
        %596 = vmatpush1.msra.mxu0 0.0
        %597 = vmatprep.subr.mxu0 0.0
        %598 = vmatpush1.msra.mxu0 0.0
        %599 = vmatprep.subr.mxu0 0.0
        %600 = vmatpush1.msra.mxu0 0.0
        %601 = vmatprep.subr.mxu0 0.0
        %602 = vmatpush1.msra.mxu0 0.0
        %603 = vmatprep.subr.mxu0 0.0
        %604 = vmatpush1.msra.mxu0 0.0
        %605 = vmatprep.mubr.f32.mxu0 0.0
        %606 = vmatmul.mubr.f32.gmra.mrb[0].mxu0 %v539
        %v607 = vpop.f32.mrb[0].mxu0
        %v608 = vadd.f32 0.0, %v607
        %v609 = vpop.f32.mrb[0].mxu0
        %610 = vdwg.mxu0
        %v611 = vadd.f32 %v540, %v608
        %vm612 = vcmask 27648
        %613 = vst.msk [vmem:[%s202] sm:$0xf] %vm612, %v611
        %s614 = sand.u32 %s100, 1
        %s615 = scalar_lea.sflag [#allocation3], %s614
        %s616 = sand.u32 %s100, 1
        %s617 = smul.addr %s616, 4
        %s618 = scalar_lea.vmem [#allocation2], %s617
        // Predicated region
        $region33: #{tpu_custom_call.1} parent=27 // pred_check
          %p619 = pneg %p110
        $region34: #{tpu_custom_call.1} parent=27 // pred_check_branch
          %621 = sbr.rel (%p619) target = $region36
        $region35: #{tpu_custom_call.1} parent=27 // pred_region
          %s623 = ssub.s32 64, 64
          %624 = vsyncadd %s615, %s623
          %s625 = smul.addr %s20, 64
          %s626 = scalar_lea.hbm %s2, %s625
          %s628 = sshll.u32 %s618, 4
          %s629 = int_to_ptr.vmem [resolvable:$true] %s628
          %631 = dma.vmem_to_hbm [thread:$0]  %s629, 64, %s626, %s615
        $region36: #{tpu_custom_call.1} parent=27 // pred_fallthru
          _
      $region28: #{tpu_custom_call.1} parent=5 // pred_fallthru
        _
      %p632 = scmp.le.s32.totalorder 2, %s11
      // Predicated region
      $region37: #{tpu_custom_call.1} parent=5 // pred_check
        %p633 = pneg %p632
      $region38: #{tpu_custom_call.1} parent=5 // pred_check_branch
        %635 = sbr.rel (%p633) target = $region40
      $region39: #{tpu_custom_call.1} parent=5 // pred_region
        %s636 = ssub.s32 %s11, 2
        // Predicated region
        $region41: #{tpu_custom_call.1} parent=39 // pred_check
          %p637 = pneg %p116
        $region42: #{tpu_custom_call.1} parent=39 // pred_check_branch
          %639 = sbr.rel (%p637) target = $region44
        $region43: #{tpu_custom_call.1} parent=39 // pred_region
          %s640 = sand.u32 %s101, 1
          %s641 = scalar_lea.sflag [#allocation3], %s640
          %s642 = sand.u32 %s101, 1
          %s643 = smul.addr %s642, 4
          %s644 = scalar_lea.vmem [#allocation2], %s643
          %645 = dma.done %s641, 64
        $region44: #{tpu_custom_call.1} parent=39 // pred_fallthru
          _
      $region40: #{tpu_custom_call.1} parent=5 // pred_fallthru
        _
    $region6: #{tpu_custom_call.1} parent=1 // loop_footer
      %s15 = sadd.s32 1, %s11
    $region7: #{tpu_custom_call.1} parent=1 // loop_footer_branch
      %10 = sbr.rel target = $region3
    $region8: #{tpu_custom_call.1} parent=1 // loop_exit
      _
    %646 = vsyncpa [#allocation3], 1
    %s647 = scalar_lea.sflag [#allocation3], 1
    %648 = vsyncpa %s647, 1

</llo_original>
